<compile_context>
chip_gen: v5e
topology: v5e:2x2
jax: 0.10.0
libtpu: 0.0.40
codegen_flags: <defaults>
</compile_context>

<pallas_src>
import functools

import jax
import jax.numpy as jnp
from jax.experimental import pallas as pl
from jax.experimental.pallas import tpu as pltpu

_EPS = 1e-5
_LANE = 128


# ---------------------------------------------------------------------------
# helpers (wrapper-side glue)
# ---------------------------------------------------------------------------
def _round_up(v, m):
    return ((v + m - 1) // m) * m


def _pad_axis(a, axis, mult, value=0.0):
    size = a.shape[axis]
    pad = (-size) % mult
    if pad == 0:
        return a
    widths = [(0, 0)] * a.ndim
    widths[axis] = (0, pad)
    return jnp.pad(a, widths, constant_values=value)


def _pick_tm(m):
    if m >= 2048:
        return 512
    if m >= 1024:
        return 256
    return 128


def _im2col(x_nhwc, kh, kw, stride, padding):
    """NHWC -> (N*OH*OW, KH*KW*Cin) patches (contraction dim = taps * Cin)."""
    n, h, w, c = x_nhwc.shape
    oh = (h + 2 * padding - kh) // stride + 1
    ow = (w + 2 * padding - kw) // stride + 1
    xp = jnp.pad(x_nhwc, ((0, 0), (padding, padding), (padding, padding), (0, 0)))
    cols = []
    for i in range(kh):
        for j in range(kw):
            patch = jax.lax.slice(
                xp,
                (0, i, j, 0),
                (n, i + (oh - 1) * stride + 1, j + (ow - 1) * stride + 1, c),
                (1, stride, stride, 1))
            cols.append(patch)                        # (n, oh, ow, c)
    patches = jnp.stack(cols, axis=3)                 # (n, oh, ow, kh*kw, c)
    return patches.reshape(n * oh * ow, kh * kw * c), oh, ow


# ---------------------------------------------------------------------------
# Pallas kernels
# ---------------------------------------------------------------------------
def _matmul_stats_kernel(a_ref, b_ref, conv_ref, stats_ref, acc_ref):
    """Tiled matmul + per-M-tile BatchNorm partial statistics.

    a_ref    : (tm, tk)    im2col activation tile
    b_ref    : (tk, cp)    weight tile (full padded Cout on lanes)
    conv_ref : (tm, cp)    conv output tile (f32)
    stats_ref: (1, 2, cp)  per-M-tile [sum, sum_sq] over the tile rows
    acc_ref  : (tm, cp)    f32 VMEM accumulator, resident across the K axis
    """
    k = pl.program_id(1)

    @pl.when(k == 0)
    def _():
        acc_ref[...] = jnp.zeros_like(acc_ref)

    acc_ref[...] += jnp.dot(a_ref[...], b_ref[...],
                            preferred_element_type=jnp.float32)

    @pl.when(k == pl.num_programs(1) - 1)
    def _():
        acc = acc_ref[...]
        conv_ref[...] = acc.astype(conv_ref.dtype)
        s0 = jnp.sum(acc, axis=0, keepdims=True)          # (1, cp)
        s1 = jnp.sum(acc * acc, axis=0, keepdims=True)    # (1, cp)
        stats_ref[...] = jnp.concatenate([s0, s1], axis=0)[None]


def _bn_act_kernel(conv_ref, scale_ref, shift_ref, out_ref, *, relu):
    """Folded BatchNorm affine (+ optional ReLU): y = conv*scale + shift."""
    y = conv_ref[...] * scale_ref[...] + shift_ref[...]
    if relu:
        y = jnp.maximum(y, 0.0)
    out_ref[...] = y.astype(out_ref.dtype)


def _se_fc_kernel(pool_ref, w1_ref, w2_ref, out_ref):
    """SE excitation: sigmoid(relu(pool @ W1) @ W2)."""
    h = jnp.dot(pool_ref[...], w1_ref[...], preferred_element_type=jnp.float32)
    h = jnp.maximum(h, 0.0)
    s = jnp.dot(h, w2_ref[...], preferred_element_type=jnp.float32)
    out_ref[...] = (1.0 / (1.0 + jnp.exp(-s))).astype(out_ref.dtype)


def _se_residual_relu_kernel(y_ref, sc_ref, se_ref, out_ref):
    """out = relu(y * se_gate + shortcut); se gate broadcast per batch element."""
    out_ref[...] = jnp.maximum(y_ref[...] * se_ref[...] + sc_ref[...],
                               0.0).astype(out_ref.dtype)


# ---------------------------------------------------------------------------
# ConvBnRelu: im2col matmul kernel + cross-tile stats + normalize kernel
# ---------------------------------------------------------------------------
def conv_bn_act(x_nhwc, weight_oihw, gamma, beta, *, stride, padding, relu,
                eps=_EPS):
    """Conv2d(bias=False) + BatchNorm2d (training batch stats) + optional ReLU."""
    n, h, w, cin = x_nhwc.shape
    cout, cin_w, kh, kw = weight_oihw.shape
    # TODO(synk): grouped convolution (groups > 1) not implemented.
    assert cin_w == cin, "groups > 1 not supported"

    a_mat, oh, ow = _im2col(x_nhwc, kh, kw, stride, padding)     # (M, K)
    m_true, k_true = a_mat.shape
    b_mat = jnp.transpose(weight_oihw, (2, 3, 1, 0)).reshape(k_true, cout)

    tm = _pick_tm(m_true)
    tk = _LANE

    a_mat = _pad_axis(_pad_axis(a_mat, 0, tm), 1, tk)            # (Mp, Kp)
    b_mat = _pad_axis(_pad_axis(b_mat, 0, tk), 1, _LANE)         # (Kp, Cp)
    mp, kp = a_mat.shape
    cp = b_mat.shape[1]
    nm, nk = mp // tm, kp // tk

    gamma_p = _pad_axis(gamma.astype(jnp.float32).reshape(1, cout), 1, _LANE, 1.0)
    beta_p = _pad_axis(beta.astype(jnp.float32).reshape(1, cout), 1, _LANE, 0.0)

    conv, stats = pl.pallas_call(
        _matmul_stats_kernel,
        grid_spec=pltpu.PrefetchScalarGridSpec(
            num_scalar_prefetch=0,
            grid=(nm, nk),
            in_specs=[
                pl.BlockSpec((tm, tk), lambda i, k: (i, k)),
                pl.BlockSpec((tk, cp), lambda i, k: (k, 0)),
            ],
            out_specs=[
                pl.BlockSpec((tm, cp), lambda i, k: (i, 0)),
                pl.BlockSpec((1, 2, cp), lambda i, k: (i, 0, 0)),
            ],
            scratch_shapes=[pltpu.VMEM((tm, cp), jnp.float32)]),
        out_shape=(
            jax.ShapeDtypeStruct((mp, cp), jnp.float32),
            jax.ShapeDtypeStruct((nm, 2, cp), jnp.float32),
        ),
        compiler_params=pltpu.CompilerParams(
            dimension_semantics=("parallel", "arbitrary"),
            vmem_limit_bytes=32 * 1024 * 1024),
    )(a_mat, b_mat)

    # Cross-tile BN statistic reduction (tiny (2, Cp)); fold BN into scale/shift.
    tot = jnp.sum(stats, axis=0)                       # (2, cp)
    mean = tot[0] / float(m_true)
    var = jnp.maximum(tot[1] / float(m_true) - mean * mean, 0.0)
    inv_std = jax.lax.rsqrt(var + eps)
    scale = (gamma_p[0] * inv_std).reshape(1, cp)
    shift = (beta_p[0] - mean * gamma_p[0] * inv_std).reshape(1, cp)

    y = pl.pallas_call(
        functools.partial(_bn_act_kernel, relu=relu),
        grid=(nm,),
        in_specs=[
            pl.BlockSpec((tm, cp), lambda i: (i, 0)),
            pl.BlockSpec((1, cp), lambda i: (0, 0)),
            pl.BlockSpec((1, cp), lambda i: (0, 0)),
        ],
        out_specs=pl.BlockSpec((tm, cp), lambda i: (i, 0)),
        out_shape=jax.ShapeDtypeStruct((mp, cp), jnp.float32),
        compiler_params=pltpu.CompilerParams(
            dimension_semantics=("parallel",)),
    )(conv, scale, shift)

    return y[:m_true, :cout].reshape(n, oh, ow, cout)


# ---------------------------------------------------------------------------
# SELayer and the final fusion
# ---------------------------------------------------------------------------
def se_layer(y_nhwc, w_fc1, w_fc2):
    """SELayer gate: avg-pool(H,W) -> fc1 -> ReLU -> fc2 -> sigmoid -> (N, C)."""
    n, oh, ow, c = y_nhwc.shape
    hidden = w_fc1.shape[0]
    pooled = jnp.mean(y_nhwc, axis=(1, 2))             # (N, C) tiny XLA reduce
    cp = _round_up(c, _LANE)
    hp = _round_up(hidden, _LANE)

    p = _pad_axis(pooled.astype(jnp.float32), 1, _LANE)                    # (N, cp)
    w1 = _pad_axis(_pad_axis(jnp.transpose(w_fc1), 0, _LANE), 1, _LANE)    # (cp, hp)
    w2 = _pad_axis(_pad_axis(jnp.transpose(w_fc2), 0, _LANE), 1, _LANE)    # (hp, cp)

    se = pl.pallas_call(
        _se_fc_kernel,
        grid=(1,),
        in_specs=[
            pl.BlockSpec((n, cp), lambda i: (0, 0)),
            pl.BlockSpec((cp, hp), lambda i: (0, 0)),
            pl.BlockSpec((hp, cp), lambda i: (0, 0)),
        ],
        out_specs=pl.BlockSpec((n, cp), lambda i: (0, 0)),
        out_shape=jax.ShapeDtypeStruct((n, cp), jnp.float32),
    )(p, w1, w2)
    return se[:, :c]


def se_residual_relu(y_nhwc, sc_nhwc, se_nc):
    """out = ReLU(y * se_gate + shortcut), fused elementwise Pallas pass."""
    n, oh, ow, c = y_nhwc.shape
    assert sc_nhwc.shape == y_nhwc.shape
    hw = oh * ow
    cp = _round_up(c, _LANE)

    y = _pad_axis(y_nhwc.astype(jnp.float32).reshape(n, hw, c), 2, _LANE)
    s = _pad_axis(sc_nhwc.astype(jnp.float32).reshape(n, hw, c), 2, _LANE)
    se = _pad_axis(se_nc.astype(jnp.float32).reshape(n, 1, c), 2, _LANE)

    t_hw = hw
    for cand in (512, 256, 128, 64, 32, 16, 8):
        if hw % cand == 0:
            t_hw = cand
            break

    out = pl.pallas_call(
        _se_residual_relu_kernel,
        grid=(n, hw // t_hw),
        in_specs=[
            pl.BlockSpec((1, t_hw, cp), lambda b, i: (b, i, 0)),
            pl.BlockSpec((1, t_hw, cp), lambda b, i: (b, i, 0)),
            pl.BlockSpec((1, 1, cp), lambda b, i: (b, 0, 0)),
        ],
        out_specs=pl.BlockSpec((1, t_hw, cp), lambda b, i: (b, i, 0)),
        out_shape=jax.ShapeDtypeStruct((n, hw, cp), jnp.float32),
        compiler_params=pltpu.CompilerParams(
            dimension_semantics=("parallel", "parallel")),
    )(y, s, se)

    return out[:, :, :c].reshape(n, oh, ow, c)


# ---------------------------------------------------------------------------
# Full BottleneckBlock forward
# ---------------------------------------------------------------------------
def bottleneck_block(x_nchw, params, *, stride):
    """Forward pass of BottleneckBlock (expansion=4, training-mode BatchNorm)."""
    x = jnp.transpose(x_nchw, (0, 2, 3, 1)).astype(jnp.float32)   # NCHW -> NHWC

    y = conv_bn_act(x, params["w1"], params["g1"], params["b1"],
                    stride=1, padding=0, relu=True)
    y = conv_bn_act(y, params["w2"], params["g2"], params["b2"],
                    stride=stride, padding=1, relu=True)
    y = conv_bn_act(y, params["w3"], params["g3"], params["b3"],
                    stride=1, padding=0, relu=False)

    if "w_sc" in params:   # ShortCut with 1x1 conv-BN (stride != 1 or Cin != 4*Cout)
        sc = conv_bn_act(x, params["w_sc"], params["g_sc"], params["b_sc"],
                         stride=stride, padding=0, relu=False)
    else:                  # identity shortcut
        sc = x

    se = se_layer(y, params["w_fc1"], params["w_fc2"])
    out = se_residual_relu(y, sc, se)
    return jnp.transpose(out, (0, 3, 1, 2))                       # NHWC -> NCHW


# ---------------------------------------------------------------------------
# Pure-JAX reference (mirrors the PyTorch module, training-mode BN)
# ---------------------------------------------------------------------------
def _conv_bn_ref(x, w, g, b, stride, padding, relu, eps=_EPS):
    dn = jax.lax.conv_dimension_numbers(x.shape, w.shape, ("NCHW", "OIHW", "NCHW"))
    c = jax.lax.conv_general_dilated(x, w, (stride, stride),
                                     [(padding, padding), (padding, padding)],
                                     dimension_numbers=dn)
    mean = c.mean(axis=(0, 2, 3), keepdims=True)
    var = ((c - mean) ** 2).mean(axis=(0, 2, 3), keepdims=True)
    y = (c - mean) * jax.lax.rsqrt(var + eps) * g.reshape(1, -1, 1, 1) \
        + b.reshape(1, -1, 1, 1)
    if relu:
        y = jnp.maximum(y, 0.0)
    return y


def _bottleneck_ref(x, p, stride):
    y = _conv_bn_ref(x, p["w1"], p["g1"], p["b1"], 1, 0, True)
    y = _conv_bn_ref(y, p["w2"], p["g2"], p["b2"], stride, 1, True)
    y = _conv_bn_ref(y, p["w3"], p["g3"], p["b3"], 1, 0, False)
    sc = (_conv_bn_ref(x, p["w_sc"], p["g_sc"], p["b_sc"], stride, 0, False)
          if "w_sc" in p else x)
    pooled = y.mean(axis=(2, 3))                          # (N, C)
    h = jnp.maximum(pooled @ p["w_fc1"].T, 0.0)
    s = jax.nn.sigmoid(h @ p["w_fc2"].T)                  # (N, C)
    return jnp.maximum(y * s[:, :, None, None] + sc, 0.0)


if __name__ == "__main__":
    # BottleneckBlock(in_channels=8, out_channels=8, stride=2) on a 2x8x16x16 input.
    N, CIN, H, W = 2, 8, 16, 16
    OUT_CH, STRIDE = 8, 2
    C3 = OUT_CH * 4                 # expansion = 4 -> 32
    RED = 16                        # SELayer reduction

    key = jax.random.PRNGKey(0)
    ks = jax.random.split(key, 7)
    x = jax.random.normal(ks[0], (N, CIN, H, W), dtype=jnp.float32)

    def _w(k, shape, scale=0.2):
        return scale * jax.random.normal(k, shape, dtype=jnp.float32)

    params = {
        "w1": _w(ks[1], (OUT_CH, CIN, 1, 1)),
        "g1": jnp.ones((OUT_CH,), jnp.float32),
        "b1": jnp.zeros((OUT_CH,), jnp.float32),
        "w2": _w(ks[2], (OUT_CH, OUT_CH, 3, 3)),
        "g2": jnp.ones((OUT_CH,), jnp.float32),
        "b2": jnp.zeros((OUT_CH,), jnp.float32),
        "w3": _w(ks[3], (C3, OUT_CH, 1, 1)),
        "g3": jnp.ones((C3,), jnp.float32),
        "b3": jnp.zeros((C3,), jnp.float32),
        "w_sc": _w(ks[4], (C3, CIN, 1, 1)),        # shortcut conv (stride!=1, Cin!=C3)
        "g_sc": jnp.ones((C3,), jnp.float32),
        "b_sc": jnp.zeros((C3,), jnp.float32),
        "w_fc1": _w(ks[5], (C3 // RED, C3)),       # nn.Linear(C3, C3//16).weight
        "w_fc2": _w(ks[6], (C3, C3 // RED)),       # nn.Linear(C3//16, C3).weight
    }

    out = bottleneck_block(x, params, stride=STRIDE)
    out = jax.block_until_ready(out)

    ref = _bottleneck_ref(x, params, STRIDE)
    assert out.shape == ref.shape, (out.shape, ref.shape)
    max_err = float(jnp.max(jnp.abs(out - ref)))
    assert max_err < 2e-3, max_err
    print("KERNEL_OK")
</pallas_src>

<mosaic_0001>
module attributes {stable_mosaic.version = 11 : i64} {
  func.func @_matmul_stats_kernel(%arg0: i32, %arg1: i32, %arg2: memref<128x128xf32, #tpu.memory_space<vmem>>, %arg3: memref<128x128xf32, #tpu.memory_space<vmem>>, %arg4: memref<128x128xf32, #tpu.memory_space<vmem>>, %arg5: memref<1x2x128xf32, #tpu.memory_space<vmem>>, %arg6: memref<128x128xf32, #tpu.memory_space<vmem>>) attributes {dimension_semantics = [#tpu.dimension_semantics<parallel>, #tpu.dimension_semantics<arbitrary>], iteration_bounds = array<i64: 4, 1>, scalar_prefetch = 0 : i64, scratch_operands = 1 : i64, tpu.core_type = #tpu.core_type<tc>, window_params = [{transform_indices = @transform_0, window_bounds = array<i64: 128, 128>}, {transform_indices = @transform_1, window_bounds = array<i64: 128, 128>}, {transform_indices = @transform_2, window_bounds = array<i64: 128, 128>}, {transform_indices = @transform_3, window_bounds = array<i64: 1, 2, 128>}]} {
    %c0_i32 = arith.constant 0 : i32
    %0 = arith.cmpi eq, %arg1, %c0_i32 : i32
    %1 = arith.extui %0 : i1 to i32
    %c0_i32_0 = arith.constant 0 : i32
    %2 = arith.cmpi ne, %1, %c0_i32_0 : i32
    scf.if %2 {
      %cst_10 = arith.constant 0.000000e+00 : f32
      %12 = vector.broadcast %cst_10 : f32 to vector<128x128xf32>
      %c0_11 = arith.constant 0 : index
      %c0_12 = arith.constant 0 : index
      %13 = vector.load %arg6[%c0_11, %c0_12] : memref<128x128xf32, #tpu.memory_space<vmem>>, vector<128x128xf32>
      tpu.vector_store %arg6[%c0_11, %c0_12], %12 {strides = array<i32>} : memref<128x128xf32, #tpu.memory_space<vmem>>, vector<128x128xf32>,
    } else {
    }
    %c0 = arith.constant 0 : index
    %c0_1 = arith.constant 0 : index
    %3 = vector.load %arg6[%c0, %c0_1] : memref<128x128xf32, #tpu.memory_space<vmem>>, vector<128x128xf32>
    %c0_2 = arith.constant 0 : index
    %c0_3 = arith.constant 0 : index
    %4 = vector.load %arg2[%c0_2, %c0_3] : memref<128x128xf32, #tpu.memory_space<vmem>>, vector<128x128xf32>
    %c0_4 = arith.constant 0 : index
    %c0_5 = arith.constant 0 : index
    %5 = vector.load %arg3[%c0_4, %c0_5] : memref<128x128xf32, #tpu.memory_space<vmem>>, vector<128x128xf32>
    %cst = arith.constant dense<0.000000e+00> : vector<128x128xf32>
    %6 = tpu.matmul %4, %5, %cst {dimension_numbers = #tpu.dot_dimension_numbers<[1], [0], [0], [1], [0, 0, 1, 1], [], []>} : vector<128x128xf32>, vector<128x128xf32>, vector<128x128xf32> -> vector<128x128xf32>
    %7 = arith.addf %3, %6 : vector<128x128xf32>
    %c0_6 = arith.constant 0 : index
    %c0_7 = arith.constant 0 : index
    %8 = vector.load %arg6[%c0_6, %c0_7] : memref<128x128xf32, #tpu.memory_space<vmem>>, vector<128x128xf32>
    tpu.vector_store %arg6[%c0_6, %c0_7], %7 {strides = array<i32>} : memref<128x128xf32, #tpu.memory_space<vmem>>, vector<128x128xf32>,
    %c0_i32_8 = arith.constant 0 : i32
    %9 = arith.cmpi eq, %arg1, %c0_i32_8 : i32
    %10 = arith.extui %9 : i1 to i32
    %c0_i32_9 = arith.constant 0 : i32
    %11 = arith.cmpi ne, %10, %c0_i32_9 : i32
    scf.if %11 {
      %c0_10 = arith.constant 0 : index
      %c0_11 = arith.constant 0 : index
      %12 = vector.load %arg6[%c0_10, %c0_11] : memref<128x128xf32, #tpu.memory_space<vmem>>, vector<128x128xf32>
      %c0_12 = arith.constant 0 : index
      %c0_13 = arith.constant 0 : index
      %13 = vector.load %arg4[%c0_12, %c0_13] : memref<128x128xf32, #tpu.memory_space<vmem>>, vector<128x128xf32>
      tpu.vector_store %arg4[%c0_12, %c0_13], %12 {strides = array<i32>} : memref<128x128xf32, #tpu.memory_space<vmem>>, vector<128x128xf32>,
      %cst_14 = arith.constant dense<0.000000e+00> : vector<128xf32>
      %14 = vector.multi_reduction <add>, %12, %cst_14 [0] : vector<128x128xf32> to vector<128xf32>
      %15 = vector.shape_cast %14 : vector<128xf32> to vector<1x128xf32>
      %16 = arith.mulf %12, %12 : vector<128x128xf32>
      %cst_15 = arith.constant dense<0.000000e+00> : vector<128xf32>
      %17 = vector.multi_reduction <add>, %16, %cst_15 [0] : vector<128x128xf32> to vector<128xf32>
      %18 = vector.shape_cast %17 : vector<128xf32> to vector<1x128xf32>
      %19 = tpu.concatenate %15, %18 in 0 : vector<1x128xf32>, vector<1x128xf32> -> vector<2x128xf32>
      %20 = vector.shape_cast %19 : vector<2x128xf32> to vector<1x2x128xf32>
      %c0_16 = arith.constant 0 : index
      %c0_17 = arith.constant 0 : index
      %c0_18 = arith.constant 0 : index
      %21 = vector.load %arg5[%c0_16, %c0_17, %c0_18] : memref<1x2x128xf32, #tpu.memory_space<vmem>>, vector<1x2x128xf32>
      tpu.vector_store %arg5[%c0_16, %c0_17, %c0_18], %20 {strides = array<i32>} : memref<1x2x128xf32, #tpu.memory_space<vmem>>, vector<1x2x128xf32>,
    } else {
    }
    return
  }
  func.func @transform_0(%arg0: i32, %arg1: i32) -> (i32, i32) {
    %c0_i32 = arith.constant 0 : i32
    return %arg0, %arg1 : i32, i32
  }
  func.func @transform_1(%arg0: i32, %arg1: i32) -> (i32, i32) {
    %c0_i32 = arith.constant 0 : i32
    %c0_i32_0 = arith.constant 0 : i32
    return %arg1, %c0_i32 : i32, i32
  }
  func.func @transform_2(%arg0: i32, %arg1: i32) -> (i32, i32) {
    %c0_i32 = arith.constant 0 : i32
    %c0_i32_0 = arith.constant 0 : i32
    return %arg0, %c0_i32 : i32, i32
  }
  func.func @transform_3(%arg0: i32, %arg1: i32) -> (i32, i32, i32) {
    %c0_i32 = arith.constant 0 : i32
    %c0_i32_0 = arith.constant 0 : i32
    %c0_i32_1 = arith.constant 0 : i32
    return %arg0, %c0_i32, %c0_i32_0 : i32, i32, i32
  }
}

</mosaic_0001>

<llo_original>
// kernel: tpu_custom_call.1
$region0: #{tpu_custom_call.1}
  #allocation0 [shape = 'u32[]', space=smem, size = 0x4, offset = 0x4, fixed_abs, tag = 'smem constant byte address 0x4 - core index']
  #allocation1 [shape = 'u32[72,128]{1,0:T(1,128)}', space=vmem, size = 0x9000, scoped, tag = 'internal scratch']
  #allocation2 [shape = 'f32[128,128]{1,0:T(8,128)}', space=vmem, size = 0x10000, scoped, tag = 'scratch operand']
  %s0 = inlined_call_operand.hbm [shape: f32[512,128], index: 0, kind: input, shape index: {}]
  %s1 = inlined_call_operand.hbm [shape: f32[128,128], index: 1, kind: input, shape index: {}]
  %s2 = inlined_call_operand.hbm [shape: f32[512,128], index: 2, kind: output, shape index: {0}]
  %s3 = inlined_call_operand.hbm [shape: f32[4,2,128], index: 3, kind: output, shape index: {1}]
  %4 = xla_tuple %s2, %s3
  %s5 = sld [smem:[#allocation0]]
  $region65: #{tpu_custom_call.1} parent=0
    _
  %s7 = ssub.s32 1, %s5
  %s8 = scalar_select 0, %s7, %s5
  $region1: #{tpu_custom_call.1} parent=0
    #allocation3 [shape = 'u8[131072]{0}', space=vmem, size = 0x20000, scoped, tag = 'input window, operand 0']
    #allocation4 [shape = 's32[2]{0}', space=sflag, size = 0x8, scoped, tag = 'scoped memory for tpu_custom_call.1']
    #allocation5 [shape = 's32[2]{0}', space=sflag, size = 0x8, scoped, tag = 'scoped memory for tpu_custom_call.1']
    #allocation6 [shape = 'u8[65536]{0}', space=vmem, size = 0x10000, scoped, tag = 'input window, operand 1, single buffered']
    #allocation7 [shape = 's32[1]{0}', space=sflag, size = 0x4, scoped, tag = 'scoped memory for tpu_custom_call.1']
    #allocation8 [shape = 'u8[131072]{0}', space=vmem, size = 0x20000, scoped, tag = 'output window, operand 0']
    #allocation9 [shape = 'u8[2048]{0}', space=vmem, size = 0x800, scoped, tag = 'output window, operand 1']
    #allocation10 [shape = 's32[2]{0}', space=sflag, size = 0x8, scoped, tag = 'scoped memory for tpu_custom_call.1']
    %9 = vsyncpa [#allocation4], 0
    %s10 = scalar_lea.sflag [#allocation4], 1
    %11 = vsyncpa %s10, 0
    %12 = vsyncpa [#allocation7], 0
    %13 = vsyncpa [#allocation5], 0
    %s14 = scalar_lea.sflag [#allocation5], 1
    %15 = vsyncpa %s14, 0
    %16 = vsyncpa [#allocation10], 0
    %s17 = scalar_lea.sflag [#allocation10], 1
    %18 = vsyncpa %s17, 0
    loop: start=0, step=1, limit=6
    $region2: #{tpu_custom_call.1} parent=1 // loop_pre_header
      _
    $region3: #{tpu_custom_call.1} parent=1 // loop_header
      %s20 = sphi 0, %s24
      %p21 = scmp.ge.s32.totalorder %s20, 6
      %s27 = sphi 0, %s39
      %s28 = sphi 0, %s35
      %s29 = sphi 0, %s27
      %s30 = sphi 0, %s28
      %s31 = sphi 0, %s29
      %s32 = sphi 0, %s30
      %s44 = sphi 0, %s46
      %s47 = sphi 0, %s44
      %s48 = sphi 0, %s47
      %s64 = sphi 0, %s48
      %s70 = sphi 0, %s72
      %s73 = sphi 0, %s70
      %s74 = sphi 0, %s73
      %s90 = sphi 0, %s74
      %s96 = sphi 0, %s98
      %s99 = sphi 0, %s96
      %s100 = sphi 0, %s99
      %s116 = sphi 0, %s100
      %s122 = sphi 0, %s124
      %s125 = sphi 0, %s122
      %s126 = sphi 0, %s125
      %s142 = sphi 0, %s126
    $region4: #{tpu_custom_call.1} parent=1 // loop_header_branch
      %23 = sbr.rel (%p21) target = $region8
    $region5: #{tpu_custom_call.1} parent=1 // loop_body
      %s25 = ssub.s32 %s20, 1
      %s26 = ssub.s32 %s20, 2
      %s33 = sadd.s32 1, %s28
      %p34 = scmp.ge.s32.totalorder %s33, 1
      %s35 = scalar_select %p34, 0, %s33
      %s36 = sadd.s32 1, %s27
      %s37 = scalar_select %p34, %s36, %s27
      %p38 = scmp.ge.s32.totalorder %s37, 4
      %s39 = scalar_select %p38, 0, %s37
      %s40 = ssub.s32 %s27, %s39
      %s41 = ssub.s32 %s28, %s35
      %s42 = sor.u32 %s40, %s41
      %p43 = scmp.eq.s32.totalorder %s42, 0
      %s45 = sadd.s32 %s44, 1
      %s46 = scalar_select %p43, %s44, %s45
      %p49 = pneg %p43
      %p50 = scmp.eq.s32.totalorder %s20, 3
      %p51 = por %p49, %p50
      %p52 = scmp.ne.s32.totalorder %s44, %s47
      %p53 = scmp.eq.s32.totalorder %s20, 0
      %p54 = por %p52, %p53
      %p55 = scmp.ne.s32.totalorder %s44, %s47
      %p56 = scmp.eq.s32.totalorder %s25, 3
      %p57 = por %p55, %p56
      %p58 = scmp.ne.s32.totalorder %s47, %s48
      %p59 = scmp.eq.s32.totalorder %s25, 0
      %p60 = por %p58, %p59
      %p61 = scmp.ne.s32.totalorder %s47, %s48
      %p62 = scmp.eq.s32.totalorder %s26, 3
      %p63 = por %p61, %p62
      %p65 = scmp.ne.s32.totalorder %s48, %s64
      %p66 = scmp.eq.s32.totalorder %s26, 0
      %p67 = por %p65, %p66
      %s68 = ssub.s32 %s28, %s35
      %p69 = scmp.eq.s32.totalorder %s68, 0
      %s71 = sadd.s32 %s70, 1
      %s72 = scalar_select %p69, %s70, %s71
      %p75 = pneg %p69
      %p76 = scmp.eq.s32.totalorder %s20, 3
      %p77 = por %p75, %p76
      %p78 = scmp.ne.s32.totalorder %s70, %s73
      %p79 = scmp.eq.s32.totalorder %s20, 0
      %p80 = por %p78, %p79
      %p81 = scmp.ne.s32.totalorder %s70, %s73
      %p82 = scmp.eq.s32.totalorder %s25, 3
      %p83 = por %p81, %p82
      %p84 = scmp.ne.s32.totalorder %s73, %s74
      %p85 = scmp.eq.s32.totalorder %s25, 0
      %p86 = por %p84, %p85
      %p87 = scmp.ne.s32.totalorder %s73, %s74
      %p88 = scmp.eq.s32.totalorder %s26, 3
      %p89 = por %p87, %p88
      %p91 = scmp.ne.s32.totalorder %s74, %s90
      %p92 = scmp.eq.s32.totalorder %s26, 0
      %p93 = por %p91, %p92
      %s94 = ssub.s32 %s27, %s39
      %p95 = scmp.eq.s32.totalorder %s94, 0
      %s97 = sadd.s32 %s96, 1
      %s98 = scalar_select %p95, %s96, %s97
      %p101 = pneg %p95
      %p102 = scmp.eq.s32.totalorder %s20, 3
      %p103 = por %p101, %p102
      %p104 = scmp.ne.s32.totalorder %s96, %s99
      %p105 = scmp.eq.s32.totalorder %s20, 0
      %p106 = por %p104, %p105
      %p107 = scmp.ne.s32.totalorder %s96, %s99
      %p108 = scmp.eq.s32.totalorder %s25, 3
      %p109 = por %p107, %p108
      %p110 = scmp.ne.s32.totalorder %s99, %s100
      %p111 = scmp.eq.s32.totalorder %s25, 0
      %p112 = por %p110, %p111
      %p113 = scmp.ne.s32.totalorder %s99, %s100
      %p114 = scmp.eq.s32.totalorder %s26, 3
      %p115 = por %p113, %p114
      %p117 = scmp.ne.s32.totalorder %s100, %s116
      %p118 = scmp.eq.s32.totalorder %s26, 0
      %p119 = por %p117, %p118
      %s120 = ssub.s32 %s27, %s39
      %p121 = scmp.eq.s32.totalorder %s120, 0
      %s123 = sadd.s32 %s122, 1
      %s124 = scalar_select %p121, %s122, %s123
      %p127 = pneg %p121
      %p128 = scmp.eq.s32.totalorder %s20, 3
      %p129 = por %p127, %p128
      %p130 = scmp.ne.s32.totalorder %s122, %s125
      %p131 = scmp.eq.s32.totalorder %s20, 0
      %p132 = por %p130, %p131
      %p133 = scmp.ne.s32.totalorder %s122, %s125
      %p134 = scmp.eq.s32.totalorder %s25, 3
      %p135 = por %p133, %p134
      %p136 = scmp.ne.s32.totalorder %s125, %s126
      %p137 = scmp.eq.s32.totalorder %s25, 0
      %p138 = por %p136, %p137
      %p139 = scmp.ne.s32.totalorder %s125, %s126
      %p140 = scmp.eq.s32.totalorder %s26, 3
      %p141 = por %p139, %p140
      %p143 = scmp.ne.s32.totalorder %s126, %s142
      %p144 = scmp.eq.s32.totalorder %s26, 0
      %p145 = por %p143, %p144
      %p146 = scmp.le.s32.totalorder 1, %s20
      %p147 = scmp.lt.s32.totalorder %s20, 5
      %p148 = pnand %p146, %p147
      %p149 = pneg %p148
      // Predicated region
      $region9: #{tpu_custom_call.1} parent=5 // pred_check
        _
      $region10: #{tpu_custom_call.1} parent=5 // pred_check_branch
        %151 = sbr.rel (%p148) target = $region12
      $region11: #{tpu_custom_call.1} parent=5 // pred_region
        %s152 = ssub.s32 %s20, 1
        // Predicated region
        $region13: #{tpu_custom_call.1} parent=11 // pred_check
          %p153 = pneg %p86
        $region14: #{tpu_custom_call.1} parent=11 // pred_check_branch
          %155 = sbr.rel (%p153) target = $region16
        $region15: #{tpu_custom_call.1} parent=11 // pred_region
          %s156 = smul.u32 16, %s30
          %158 = vsyncadd [#allocation7], 0
          %s159 = smul.addr %s156, 8
          %s160 = scalar_lea.hbm %s1, %s159
          %s161 = sshll.u32 %s160, 4
          %s162 = int_to_ptr.hbm [resolvable:$true] %s161
          %s163 = sshll.u32 [#allocation6], 4
          %s164 = int_to_ptr.vmem [resolvable:$true] %s163
          %169 = dma.hbm_to_vmem [thread:$0]  %s162, 2048, %s164, [#allocation7], 128, 128, 8
        $region16: #{tpu_custom_call.1} parent=11 // pred_fallthru
          _
      $region12: #{tpu_custom_call.1} parent=5 // pred_fallthru
        _
      %p170 = scmp.lt.s32.totalorder %s20, 4
      // Predicated region
      $region17: #{tpu_custom_call.1} parent=5 // pred_check
        %p171 = pneg %p170
      $region18: #{tpu_custom_call.1} parent=5 // pred_check_branch
        %173 = sbr.rel (%p171) target = $region20
      $region19: #{tpu_custom_call.1} parent=5 // pred_region
        // Predicated region
        $region21: #{tpu_custom_call.1} parent=19 // pred_check
          %p174 = pneg %p54
        $region22: #{tpu_custom_call.1} parent=19 // pred_check_branch
          %176 = sbr.rel (%p174) target = $region24
        $region23: #{tpu_custom_call.1} parent=19 // pred_region
          %s177 = sand.u32 %s44, 1
          %s178 = scalar_lea.sflag [#allocation4], %s177
          %s179 = sand.u32 %s44, 1
          %s180 = smul.addr %s179, 128
          %s181 = scalar_lea.vmem [#allocation3], %s180
          %s182 = smul.u32 16, %s27
          %184 = vsyncadd %s178, 0
          %s185 = sadd.s32 %s28, %s182
          %s186 = smul.addr %s185, 8
          %s187 = scalar_lea.hbm %s0, %s186
          %s188 = sshll.u32 %s187, 4
          %s189 = int_to_ptr.hbm [resolvable:$true] %s188
          %s190 = sshll.u32 %s181, 4
          %s191 = int_to_ptr.vmem [resolvable:$true] %s190
          %196 = dma.hbm_to_vmem [thread:$0]  %s189, 2048, %s191, %s178, 128, 128, 8
        $region24: #{tpu_custom_call.1} parent=19 // pred_fallthru
          _
      $region20: #{tpu_custom_call.1} parent=5 // pred_fallthru
        _
      %p197 = scmp.le.s32.totalorder 1, %s20
      %p198 = scmp.lt.s32.totalorder %s20, 5
      %p199 = pnand %p197, %p198
      %p200 = pneg %p199
      // Predicated region
      $region25: #{tpu_custom_call.1} parent=5 // pred_check
        _
      $region26: #{tpu_custom_call.1} parent=5 // pred_check_branch
        %202 = sbr.rel (%p199) target = $region28
      $region27: #{tpu_custom_call.1} parent=5 // pred_region
        %s203 = ssub.s32 %s20, 1
        %s204 = sand.u32 %s47, 1
        %s205 = scalar_lea.sflag [#allocation4], %s204
        %s206 = sand.u32 %s47, 1
        %s207 = smul.addr %s206, 128
        %s208 = scalar_lea.vmem [#allocation3], %s207
        // Predicated region
        $region29: #{tpu_custom_call.1} parent=27 // pred_check
          %p209 = pneg %p60
        $region30: #{tpu_custom_call.1} parent=27 // pred_check_branch
          %211 = sbr.rel (%p209) target = $region32
        $region31: #{tpu_custom_call.1} parent=27 // pred_region
          %213 = dma.done %s205, 2048
        $region32: #{tpu_custom_call.1} parent=27 // pred_fallthru
          _
        // Predicated region
        $region33: #{tpu_custom_call.1} parent=27 // pred_check
          %p214 = pneg %p86
        $region34: #{tpu_custom_call.1} parent=27 // pred_check_branch
          %216 = sbr.rel (%p214) target = $region36
        $region35: #{tpu_custom_call.1} parent=27 // pred_region
          %218 = dma.done [#allocation7], 2048
        $region36: #{tpu_custom_call.1} parent=27 // pred_fallthru
          _
        %s219 = sand.u32 %s47, 1
        %s220 = scalar_lea.sflag [#allocation4], %s219
        %s221 = sand.u32 %s47, 1
        %s222 = smul.addr %s221, 128
        %s223 = scalar_lea.vmem [#allocation3], %s222
        %p224 = pneg %p60
        %p225 = pneg %p57
        %p226 = pneg %p86
        %p227 = pneg %p83
        %p228 = pneg %p112
        %p229 = pneg %p109
        %s230 = sand.u32 %s99, 1
        %s231 = scalar_lea.sflag [#allocation5], %s230
        %s232 = sand.u32 %s99, 1
        %s233 = smul.addr %s232, 128
        %s234 = scalar_lea.vmem [#allocation8], %s233
        %p235 = pneg %p138
        %p236 = pneg %p135
        %s237 = sand.u32 %s125, 1
        %s238 = scalar_lea.sflag [#allocation10], %s237
        %s239 = sand.u32 %s125, 1
        %s240 = smul.addr %s239, 2
        %s241 = scalar_lea.vmem [#allocation9], %s240
        %s242 = smul.u32 16, %s29
        %s243 = smul.u32 16, %s30
        %s244 = smul.u32 16, %s29
        %p245 = scmp.eq.s32.totalorder %s30, 0
        // Predicated region
        $region37: #{tpu_custom_call.1} parent=27 // pred_check
          %p246 = pneg %p245
        $region38: #{tpu_custom_call.1} parent=27 // pred_check_branch
          %248 = sbr.rel (%p246) target = $region40
        $region39: #{tpu_custom_call.1} parent=27 // pred_region
          %249 = vst [vmem:[#allocation2] sm:$0xff] 0.0
          %250 = vst [vmem:[#allocation2 + $0x8] sm:$0xff] 0.0
          %251 = vst [vmem:[#allocation2 + $0x10] sm:$0xff] 0.0
          %252 = vst [vmem:[#allocation2 + $0x18] sm:$0xff] 0.0
          %253 = vst [vmem:[#allocation2 + $0x20] sm:$0xff] 0.0
          %254 = vst [vmem:[#allocation2 + $0x28] sm:$0xff] 0.0
          %255 = vst [vmem:[#allocation2 + $0x30] sm:$0xff] 0.0
          %256 = vst [vmem:[#allocation2 + $0x38] sm:$0xff] 0.0
          %257 = vst [vmem:[#allocation2 + $0x40] sm:$0xff] 0.0
          %258 = vst [vmem:[#allocation2 + $0x48] sm:$0xff] 0.0
          %259 = vst [vmem:[#allocation2 + $0x50] sm:$0xff] 0.0
          %260 = vst [vmem:[#allocation2 + $0x58] sm:$0xff] 0.0
          %261 = vst [vmem:[#allocation2 + $0x60] sm:$0xff] 0.0
          %262 = vst [vmem:[#allocation2 + $0x68] sm:$0xff] 0.0
          %263 = vst [vmem:[#allocation2 + $0x70] sm:$0xff] 0.0
          %264 = vst [vmem:[#allocation2 + $0x78] sm:$0xff] 0.0
        $region40: #{tpu_custom_call.1} parent=27 // pred_fallthru
          _
        %v265 = vld [vmem:[#allocation2] sm:$0xff]
        %v266 = vld [vmem:[#allocation2 + $0x8] sm:$0xff]
        %v267 = vld [vmem:[#allocation2 + $0x10] sm:$0xff]
        %v268 = vld [vmem:[#allocation2 + $0x18] sm:$0xff]
        %v269 = vld [vmem:[#allocation2 + $0x20] sm:$0xff]
        %v270 = vld [vmem:[#allocation2 + $0x28] sm:$0xff]
        %v271 = vld [vmem:[#allocation2 + $0x30] sm:$0xff]
        %v272 = vld [vmem:[#allocation2 + $0x38] sm:$0xff]
        %v273 = vld [vmem:[#allocation2 + $0x40] sm:$0xff]
        %v274 = vld [vmem:[#allocation2 + $0x48] sm:$0xff]
        %v275 = vld [vmem:[#allocation2 + $0x50] sm:$0xff]
        %v276 = vld [vmem:[#allocation2 + $0x58] sm:$0xff]
        %v277 = vld [vmem:[#allocation2 + $0x60] sm:$0xff]
        %v278 = vld [vmem:[#allocation2 + $0x68] sm:$0xff]
        %v279 = vld [vmem:[#allocation2 + $0x70] sm:$0xff]
        %v280 = vld [vmem:[#allocation2 + $0x78] sm:$0xff]
        %v281 = vld [vmem:[%s208] sm:$0xff]
        %v282 = vld [vmem:[%s208 + $0x8] sm:$0xff]
        %v283 = vld [vmem:[%s208 + $0x10] sm:$0xff]
        %v284 = vld [vmem:[%s208 + $0x18] sm:$0xff]
        %v285 = vld [vmem:[%s208 + $0x20] sm:$0xff]
        %v286 = vld [vmem:[%s208 + $0x28] sm:$0xff]
        %v287 = vld [vmem:[%s208 + $0x30] sm:$0xff]
        %v288 = vld [vmem:[%s208 + $0x38] sm:$0xff]
        %v289 = vld [vmem:[%s208 + $0x40] sm:$0xff]
        %v290 = vld [vmem:[%s208 + $0x48] sm:$0xff]
        %v291 = vld [vmem:[%s208 + $0x50] sm:$0xff]
        %v292 = vld [vmem:[%s208 + $0x58] sm:$0xff]
        %v293 = vld [vmem:[%s208 + $0x60] sm:$0xff]
        %v294 = vld [vmem:[%s208 + $0x68] sm:$0xff]
        %v295 = vld [vmem:[%s208 + $0x70] sm:$0xff]
        %v296 = vld [vmem:[%s208 + $0x78] sm:$0xff]
        %v297 = vld [vmem:[#allocation6] sm:$0xff]
        %v298 = vld [vmem:[#allocation6 + $0x8] sm:$0xff]
        %v299 = vld [vmem:[#allocation6 + $0x10] sm:$0xff]
        %v300 = vld [vmem:[#allocation6 + $0x18] sm:$0xff]
        %v301 = vld [vmem:[#allocation6 + $0x20] sm:$0xff]
        %v302 = vld [vmem:[#allocation6 + $0x28] sm:$0xff]
        %v303 = vld [vmem:[#allocation6 + $0x30] sm:$0xff]
        %v304 = vld [vmem:[#allocation6 + $0x38] sm:$0xff]
        %v305 = vld [vmem:[#allocation6 + $0x40] sm:$0xff]
        %v306 = vld [vmem:[#allocation6 + $0x48] sm:$0xff]
        %v307 = vld [vmem:[#allocation6 + $0x50] sm:$0xff]
        %v308 = vld [vmem:[#allocation6 + $0x58] sm:$0xff]
        %v309 = vld [vmem:[#allocation6 + $0x60] sm:$0xff]
        %v310 = vld [vmem:[#allocation6 + $0x68] sm:$0xff]
        %v311 = vld [vmem:[#allocation6 + $0x70] sm:$0xff]
        %v312 = vld [vmem:[#allocation6 + $0x78] sm:$0xff]
        %313 = vmatpush.msra.mxu0 %v312
        %314 = vmatpush.msra.mxu0 %v311
        %315 = vmatpush.msra.mxu0 %v310
        %316 = vmatpush.msra.mxu0 %v309
        %317 = vmatpush.msra.mxu0 %v308
        %318 = vmatpush.msra.mxu0 %v307
        %319 = vmatpush.msra.mxu0 %v306
        %320 = vmatpush.msra.mxu0 %v305
        %321 = vmatpush.msra.mxu0 %v304
        %322 = vmatpush.msra.mxu0 %v303
        %323 = vmatpush.msra.mxu0 %v302
        %324 = vmatpush.msra.mxu0 %v301
        %325 = vmatpush.msra.mxu0 %v300
        %326 = vmatpush.msra.mxu0 %v299
        %327 = vmatpush.msra.mxu0 %v298
        %328 = vmatpush.msra.mxu0 %v297
        %329 = vmatmul.f32.gmra.mxu0 %v281
        %v330 = vpop.f32.mrf.mxu0
        %v331 = vadd.f32 0.0, %v330
        %332 = vmatmul.f32.gmra.mxu0 %v282
        %v333 = vpop.f32.mrf.mxu0
        %v334 = vadd.f32 0.0, %v333
        %335 = vmatmul.f32.gmra.mxu0 %v283
        %v336 = vpop.f32.mrf.mxu0
        %v337 = vadd.f32 0.0, %v336
        %338 = vmatmul.f32.gmra.mxu0 %v284
        %v339 = vpop.f32.mrf.mxu0
        %v340 = vadd.f32 0.0, %v339
        %341 = vmatmul.f32.gmra.mxu0 %v285
        %v342 = vpop.f32.mrf.mxu0
        %v343 = vadd.f32 0.0, %v342
        %344 = vmatmul.f32.gmra.mxu0 %v286
        %v345 = vpop.f32.mrf.mxu0
        %v346 = vadd.f32 0.0, %v345
        %347 = vmatmul.f32.gmra.mxu0 %v287
        %v348 = vpop.f32.mrf.mxu0
        %v349 = vadd.f32 0.0, %v348
        %350 = vmatmul.f32.gmra.mxu0 %v288
        %v351 = vpop.f32.mrf.mxu0
        %v352 = vadd.f32 0.0, %v351
        %353 = vmatmul.f32.gmra.mxu0 %v289
        %v354 = vpop.f32.mrf.mxu0
        %v355 = vadd.f32 0.0, %v354
        %356 = vmatmul.f32.gmra.mxu0 %v290
        %v357 = vpop.f32.mrf.mxu0
        %v358 = vadd.f32 0.0, %v357
        %359 = vmatmul.f32.gmra.mxu0 %v291
        %v360 = vpop.f32.mrf.mxu0
        %v361 = vadd.f32 0.0, %v360
        %362 = vmatmul.f32.gmra.mxu0 %v292
        %v363 = vpop.f32.mrf.mxu0
        %v364 = vadd.f32 0.0, %v363
        %365 = vmatmul.f32.gmra.mxu0 %v293
        %v366 = vpop.f32.mrf.mxu0
        %v367 = vadd.f32 0.0, %v366
        %368 = vmatmul.f32.gmra.mxu0 %v294
        %v369 = vpop.f32.mrf.mxu0
        %v370 = vadd.f32 0.0, %v369
        %371 = vmatmul.f32.gmra.mxu0 %v295
        %v372 = vpop.f32.mrf.mxu0
        %v373 = vadd.f32 0.0, %v372
        %374 = vmatmul.f32.gmra.mxu0 %v296
        %v375 = vpop.f32.mrf.mxu0
        %v376 = vadd.f32 0.0, %v375
        %377 = vdwg.mxu0
        %v378 = vadd.f32 %v265, %v331
        %v379 = vadd.f32 %v266, %v334
        %v380 = vadd.f32 %v267, %v337
        %v381 = vadd.f32 %v268, %v340
        %v382 = vadd.f32 %v269, %v343
        %v383 = vadd.f32 %v270, %v346
        %v384 = vadd.f32 %v271, %v349
        %v385 = vadd.f32 %v272, %v352
        %v386 = vadd.f32 %v273, %v355
        %v387 = vadd.f32 %v274, %v358
        %v388 = vadd.f32 %v275, %v361
        %v389 = vadd.f32 %v276, %v364
        %v390 = vadd.f32 %v277, %v367
        %v391 = vadd.f32 %v278, %v370
        %v392 = vadd.f32 %v279, %v373
        %v393 = vadd.f32 %v280, %v376
        %394 = vst [vmem:[#allocation2] sm:$0xff] %v378
        %395 = vst [vmem:[#allocation2 + $0x8] sm:$0xff] %v379
        %396 = vst [vmem:[#allocation2 + $0x10] sm:$0xff] %v380
        %397 = vst [vmem:[#allocation2 + $0x18] sm:$0xff] %v381
        %398 = vst [vmem:[#allocation2 + $0x20] sm:$0xff] %v382
        %399 = vst [vmem:[#allocation2 + $0x28] sm:$0xff] %v383
        %400 = vst [vmem:[#allocation2 + $0x30] sm:$0xff] %v384
        %401 = vst [vmem:[#allocation2 + $0x38] sm:$0xff] %v385
        %402 = vst [vmem:[#allocation2 + $0x40] sm:$0xff] %v386
        %403 = vst [vmem:[#allocation2 + $0x48] sm:$0xff] %v387
        %404 = vst [vmem:[#allocation2 + $0x50] sm:$0xff] %v388
        %405 = vst [vmem:[#allocation2 + $0x58] sm:$0xff] %v389
        %406 = vst [vmem:[#allocation2 + $0x60] sm:$0xff] %v390
        %407 = vst [vmem:[#allocation2 + $0x68] sm:$0xff] %v391
        %408 = vst [vmem:[#allocation2 + $0x70] sm:$0xff] %v392
        %409 = vst [vmem:[#allocation2 + $0x78] sm:$0xff] %v393
        // Predicated region
        $region41: #{tpu_custom_call.1} parent=27 // pred_check
          %p410 = pneg %p245
        $region42: #{tpu_custom_call.1} parent=27 // pred_check_branch
          %412 = sbr.rel (%p410) target = $region44
        $region43: #{tpu_custom_call.1} parent=27 // pred_region
          %v413 = vld [vmem:[#allocation2] sm:$0xff]
          %v414 = vld [vmem:[#allocation2 + $0x8] sm:$0xff]
          %v415 = vld [vmem:[#allocation2 + $0x10] sm:$0xff]
          %v416 = vld [vmem:[#allocation2 + $0x18] sm:$0xff]
          %v417 = vld [vmem:[#allocation2 + $0x20] sm:$0xff]
          %v418 = vld [vmem:[#allocation2 + $0x28] sm:$0xff]
          %v419 = vld [vmem:[#allocation2 + $0x30] sm:$0xff]
          %v420 = vld [vmem:[#allocation2 + $0x38] sm:$0xff]
          %v421 = vld [vmem:[#allocation2 + $0x40] sm:$0xff]
          %v422 = vld [vmem:[#allocation2 + $0x48] sm:$0xff]
          %v423 = vld [vmem:[#allocation2 + $0x50] sm:$0xff]
          %v424 = vld [vmem:[#allocation2 + $0x58] sm:$0xff]
          %v425 = vld [vmem:[#allocation2 + $0x60] sm:$0xff]
          %v426 = vld [vmem:[#allocation2 + $0x68] sm:$0xff]
          %v427 = vld [vmem:[#allocation2 + $0x70] sm:$0xff]
          %v428 = vld [vmem:[#allocation2 + $0x78] sm:$0xff]
          %429 = vst [vmem:[%s234] sm:$0xff] %v413
          %430 = vst [vmem:[%s234 + $0x8] sm:$0xff] %v414
          %431 = vst [vmem:[%s234 + $0x10] sm:$0xff] %v415
          %432 = vst [vmem:[%s234 + $0x18] sm:$0xff] %v416
          %433 = vst [vmem:[%s234 + $0x20] sm:$0xff] %v417
          %434 = vst [vmem:[%s234 + $0x28] sm:$0xff] %v418
          %435 = vst [vmem:[%s234 + $0x30] sm:$0xff] %v419
          %436 = vst [vmem:[%s234 + $0x38] sm:$0xff] %v420
          %437 = vst [vmem:[%s234 + $0x40] sm:$0xff] %v421
          %438 = vst [vmem:[%s234 + $0x48] sm:$0xff] %v422
          %439 = vst [vmem:[%s234 + $0x50] sm:$0xff] %v423
          %440 = vst [vmem:[%s234 + $0x58] sm:$0xff] %v424
          %441 = vst [vmem:[%s234 + $0x60] sm:$0xff] %v425
          %442 = vst [vmem:[%s234 + $0x68] sm:$0xff] %v426
          %443 = vst [vmem:[%s234 + $0x70] sm:$0xff] %v427
          %444 = vst [vmem:[%s234 + $0x78] sm:$0xff] %v428
          %v445 = vadd.f32 %v413, %v414
          %v446 = vadd.f32 %v445, %v415
          %v447 = vadd.f32 %v446, %v416
          %v448 = vadd.f32 %v447, %v417
          %v449 = vadd.f32 %v448, %v418
          %v450 = vadd.f32 %v449, %v419
          %v451 = vadd.f32 %v450, %v420
          %v452 = vadd.f32 %v451, %v421
          %v453 = vadd.f32 %v452, %v422
          %v454 = vadd.f32 %v453, %v423
          %v455 = vadd.f32 %v454, %v424
          %v456 = vadd.f32 %v455, %v425
          %v457 = vadd.f32 %v456, %v426
          %v458 = vadd.f32 %v457, %v427
          %v459 = vadd.f32 %v458, %v428
          %v460 = vrot.slane %v459, 4
          %v461 = vadd.f32 %v459, %v460
          %v462 = vrot.slane %v461, 2
          %v463 = vadd.f32 %v461, %v462
          %v464 = vrot.slane %v463, 1
          %v465 = vadd.f32 %v463, %v464
          %v466 = vmul.f32 %v413, %v413
          %v467 = vmul.f32 %v414, %v414
          %v468 = vmul.f32 %v415, %v415
          %v469 = vmul.f32 %v416, %v416
          %v470 = vmul.f32 %v417, %v417
          %v471 = vmul.f32 %v418, %v418
          %v472 = vmul.f32 %v419, %v419
          %v473 = vmul.f32 %v420, %v420
          %v474 = vmul.f32 %v421, %v421
          %v475 = vmul.f32 %v422, %v422
          %v476 = vmul.f32 %v423, %v423
          %v477 = vmul.f32 %v424, %v424
          %v478 = vmul.f32 %v425, %v425
          %v479 = vmul.f32 %v426, %v426
          %v480 = vmul.f32 %v427, %v427
          %v481 = vmul.f32 %v428, %v428
          %v482 = vadd.f32 %v466, %v467
          %v483 = vadd.f32 %v482, %v468
          %v484 = vadd.f32 %v483, %v469
          %v485 = vadd.f32 %v484, %v470
          %v486 = vadd.f32 %v485, %v471
          %v487 = vadd.f32 %v486, %v472
          %v488 = vadd.f32 %v487, %v473
          %v489 = vadd.f32 %v488, %v474
          %v490 = vadd.f32 %v489, %v475
          %v491 = vadd.f32 %v490, %v476
          %v492 = vadd.f32 %v491, %v477
          %v493 = vadd.f32 %v492, %v478
          %v494 = vadd.f32 %v493, %v479
          %v495 = vadd.f32 %v494, %v480
          %v496 = vadd.f32 %v495, %v481
          %v497 = vrot.slane %v496, 4
          %v498 = vadd.f32 %v496, %v497
          %v499 = vrot.slane %v498, 2
          %v500 = vadd.f32 %v498, %v499
          %v501 = vrot.slane %v500, 1
          %v502 = vadd.f32 %v500, %v501
          %vm503 = vcmask 1040384
          %v504 = vsel %vm503, %v465, %v502
          %505 = vst [vmem:[%s241] sm:$0x3] %v504
        $region44: #{tpu_custom_call.1} parent=27 // pred_fallthru
          _
        %s506 = sand.u32 %s99, 1
        %s507 = scalar_lea.sflag [#allocation5], %s506
        %s508 = sand.u32 %s99, 1
        %s509 = smul.addr %s508, 128
        %s510 = scalar_lea.vmem [#allocation8], %s509
        %s511 = sand.u32 %s125, 1
        %s512 = scalar_lea.sflag [#allocation10], %s511
        %s513 = sand.u32 %s125, 1
        %s514 = smul.addr %s513, 2
        %s515 = scalar_lea.vmem [#allocation9], %s514
        // Predicated region
        $region45: #{tpu_custom_call.1} parent=27 // pred_check
          %p516 = pneg %p109
        $region46: #{tpu_custom_call.1} parent=27 // pred_check_branch
          %518 = sbr.rel (%p516) target = $region48
        $region47: #{tpu_custom_call.1} parent=27 // pred_region
          %s519 = smul.u32 16, %s29
          %521 = vsyncadd %s507, 0
          %s522 = smul.addr %s519, 8
          %s523 = scalar_lea.hbm %s2, %s522
          %s524 = sshll.u32 %s510, 4
          %s525 = int_to_ptr.vmem [resolvable:$true] %s524
          %s526 = sshll.u32 %s523, 4
          %s527 = int_to_ptr.hbm [resolvable:$true] %s526
          %532 = dma.vmem_to_hbm [thread:$0]  %s525, 2048, %s527, %s507, 128, 128, 8
        $region48: #{tpu_custom_call.1} parent=27 // pred_fallthru
          _
        // Predicated region
        $region49: #{tpu_custom_call.1} parent=27 // pred_check
          %p533 = pneg %p135
        $region50: #{tpu_custom_call.1} parent=27 // pred_check_branch
          %535 = sbr.rel (%p533) target = $region52
        $region51: #{tpu_custom_call.1} parent=27 // pred_region
          %537 = vsyncadd %s512, 0
          %s538 = smul.addr %s29, 2
          %s539 = scalar_lea.hbm %s3, %s538
          %s541 = sshll.u32 %s515, 4
          %s542 = int_to_ptr.vmem [resolvable:$true] %s541
          %s543 = sshll.u32 %s539, 4
          %s544 = int_to_ptr.hbm [resolvable:$true] %s543
          %546 = dma.vmem_to_hbm [thread:$0]  %s542, 32, %s544, %s512
        $region52: #{tpu_custom_call.1} parent=27 // pred_fallthru
          _
      $region28: #{tpu_custom_call.1} parent=5 // pred_fallthru
        _
      %p547 = scmp.le.s32.totalorder 2, %s20
      // Predicated region
      $region53: #{tpu_custom_call.1} parent=5 // pred_check
        %p548 = pneg %p547
      $region54: #{tpu_custom_call.1} parent=5 // pred_check_branch
        %550 = sbr.rel (%p548) target = $region56
      $region55: #{tpu_custom_call.1} parent=5 // pred_region
        %s551 = ssub.s32 %s20, 2
        // Predicated region
        $region57: #{tpu_custom_call.1} parent=55 // pred_check
          %p552 = pneg %p115
        $region58: #{tpu_custom_call.1} parent=55 // pred_check_branch
          %554 = sbr.rel (%p552) target = $region60
        $region59: #{tpu_custom_call.1} parent=55 // pred_region
          %s555 = sand.u32 %s100, 1
          %s556 = scalar_lea.sflag [#allocation5], %s555
          %s557 = sand.u32 %s100, 1
          %s558 = smul.addr %s557, 128
          %s559 = scalar_lea.vmem [#allocation8], %s558
          %561 = dma.done %s556, 2048
        $region60: #{tpu_custom_call.1} parent=55 // pred_fallthru
          _
        // Predicated region
        $region61: #{tpu_custom_call.1} parent=55 // pred_check
          %p562 = pneg %p141
        $region62: #{tpu_custom_call.1} parent=55 // pred_check_branch
          %564 = sbr.rel (%p562) target = $region64
        $region63: #{tpu_custom_call.1} parent=55 // pred_region
          %s565 = sand.u32 %s126, 1
          %s566 = scalar_lea.sflag [#allocation10], %s565
          %s567 = sand.u32 %s126, 1
          %s568 = smul.addr %s567, 2
          %s569 = scalar_lea.vmem [#allocation9], %s568
          %571 = dma.done %s566, 32
        $region64: #{tpu_custom_call.1} parent=55 // pred_fallthru
          _
      $region56: #{tpu_custom_call.1} parent=5 // pred_fallthru
        _
    $region6: #{tpu_custom_call.1} parent=1 // loop_footer
      %s24 = sadd.s32 1, %s20
    $region7: #{tpu_custom_call.1} parent=1 // loop_footer_branch
      %19 = sbr.rel target = $region3
    $region8: #{tpu_custom_call.1} parent=1 // loop_exit
      _
    %572 = vsyncpa [#allocation4], 1
    %s573 = scalar_lea.sflag [#allocation4], 1
    %574 = vsyncpa %s573, 1
    %575 = vsyncpa [#allocation7], 1
    %576 = vsyncpa [#allocation5], 1
    %s577 = scalar_lea.sflag [#allocation5], 1
    %578 = vsyncpa %s577, 1
    %579 = vsyncpa [#allocation10], 1
    %s580 = scalar_lea.sflag [#allocation10], 1
    %581 = vsyncpa %s580, 1

</llo_original>
